<compile_context>
chip_gen: v6e
topology: v6e:2x2x1
jax: 0.10.0
libtpu: 0.0.40
codegen_flags: <defaults>
</compile_context>

<pallas_src>
import functools

import jax
import jax.numpy as jnp
from jax.experimental import pallas as pl
from jax.experimental.pallas import tpu as pltpu


def _round_up(n: int, m: int) -> int:
    return ((n + m - 1) // m) * m


def mlp_kernel(x_ref,
               w1_ref, b1_ref,
               w2_ref, b2_ref,
               w3_ref, b3_ref,
               w4_ref, b4_ref,
               o_ref):
    # Layer 1: Linear + ReLU (dropout = identity in eval mode). bf16 operands, f32 acc.
    h = jnp.dot(x_ref[...], w1_ref[...], preferred_element_type=jnp.float32)
    h = jnp.maximum(h + b1_ref[...], 0.0)
    # Layer 2: Linear + ReLU
    h = jnp.dot(h.astype(jnp.bfloat16), w2_ref[...], preferred_element_type=jnp.float32)
    h = jnp.maximum(h + b2_ref[...], 0.0)
    # Layer 3: Linear + ReLU
    h = jnp.dot(h.astype(jnp.bfloat16), w3_ref[...], preferred_element_type=jnp.float32)
    h = jnp.maximum(h + b3_ref[...], 0.0)
    # Output layer: Linear, no activation
    h = jnp.dot(h.astype(jnp.bfloat16), w4_ref[...], preferred_element_type=jnp.float32)
    o_ref[...] = (h + b4_ref[...]).astype(o_ref.dtype)


def pad_params(params):
    """One-time prep (hoisted out of the forward path): zero-pad feature dims to 128
    lanes (except the first layer's input dim, which stays at the true input_dim)
    and cast weights to bf16 for the MXU.  Biases stay f32 (added post-matmul)."""
    padded = []
    for idx, (w, b) in enumerate(params):
        fi, fo = w.shape
        fi_pad = fi if idx == 0 else _round_up(fi, 128)
        fo_pad = _round_up(fo, 128)
        w_p = jnp.zeros((fi_pad, fo_pad), jnp.float32).at[:fi, :fo].set(w)
        b_p = jnp.zeros((1, fo_pad), jnp.float32).at[:, :fo].set(jnp.reshape(b, (1, fo)))
        padded.append((w_p.astype(jnp.bfloat16), b_p))
    return padded


def _choose_batch_tiling(B: int, tile_b: int):
    """Pick (TILE_B, B_pad, num_tiles).  Multiples of 16 (bf16 sublane packing).
    For large B we force >=2 tiles so v7x's two TensorCores split the parallel axis."""
    B16 = _round_up(B, 16)
    if B16 <= 1024:
        return B16, B16, 1                       # single full-extent tile
    num_tiles = max(2, -(-B16 // tile_b))        # >= 2 tiles; tile capped at tile_b
    tile = _round_up(-(-B16 // num_tiles), 16)
    return tile, tile * num_tiles, num_tiles


def mlp_classifier_forward(x, padded_params, out_dim: int, tile_b: int = 2048):
    """x: (B, input_dim) f32; padded_params: output of pad_params(); out_dim: true #classes."""
    assert len(padded_params) == 4, "kernel is specialized to 3 hidden layers + output layer"
    B, in_dim = x.shape
    assert padded_params[0][0].shape[0] == in_dim
    out_pad = padded_params[-1][0].shape[1]

    TILE_B, B_pad, num_tiles = _choose_batch_tiling(B, tile_b)

    x_bf = x.astype(jnp.bfloat16)
    if B_pad != B:
        x_bf = jnp.pad(x_bf, ((0, B_pad - B), (0, 0)))

    # x/out streamed over the batch grid; weights/biases VMEM-resident (constant block
    # index, single-buffered since they never change across grid steps).
    flat_args = [x_bf]
    in_specs = [pl.BlockSpec((TILE_B, in_dim), lambda i: (i, 0))]
    for w_p, b_p in padded_params:
        flat_args.append(w_p)
        flat_args.append(b_p)
        in_specs.append(pl.BlockSpec(w_p.shape, lambda i: (0, 0),
                                     pipeline_mode=pl.Buffered(1)))
        in_specs.append(pl.BlockSpec(b_p.shape, lambda i: (0, 0),
                                     pipeline_mode=pl.Buffered(1)))

    out_padded = pl.pallas_call(
        mlp_kernel,
        out_shape=jax.ShapeDtypeStruct((B_pad, out_pad), jnp.float32),
        grid=(num_tiles,),
        in_specs=in_specs,
        out_specs=pl.BlockSpec((TILE_B, out_pad), lambda i: (i, 0)),
        compiler_params=pltpu.CompilerParams(
            dimension_semantics=("parallel",)),
    )(*flat_args)

    return out_padded[:B, :out_dim]


def init_params(key, input_dim, hidden_dims, output_dim):
    """Deterministic init mimicking nn.Linear's uniform(-1/sqrt(fan_in), 1/sqrt(fan_in))."""
    dims = [input_dim] + list(hidden_dims) + [output_dim]
    params = []
    for i in range(len(dims) - 1):
        fan_in, fan_out = dims[i], dims[i + 1]
        key, kw, kb = jax.random.split(key, 3)
        bound = 1.0 / jnp.sqrt(float(fan_in))
        w = jax.random.uniform(kw, (fan_in, fan_out), jnp.float32, -bound, bound)
        b = jax.random.uniform(kb, (1, fan_out), jnp.float32, -bound, bound)
        params.append((w, b))
    return params


def reference_forward(x, params):
    h = x
    n = len(params)
    for i, (w, b) in enumerate(params):
        h = h @ w + b
        if i < n - 1:
            h = jnp.maximum(h, 0.0)  # ReLU (dropout is identity in eval)
    return h


if __name__ == "__main__":
    input_dim = 32
    hidden_dims = [128, 64, 32]
    output_dim = 3

    key = jax.random.PRNGKey(0)
    kx1, kx2, kp = jax.random.split(key, 3)
    params = init_params(kp, input_dim, hidden_dims, output_dim)

    # One-time padding/cast of parameters (hoisted out of the forward path) + jitted fwd.
    padded_params = pad_params(params)
    fwd = jax.jit(functools.partial(mlp_classifier_forward,
                                    padded_params=padded_params,
                                    out_dim=output_dim))

    # bf16 MXU operands -> loosen tolerance vs. the f32 reference.
    ATOL = 5e-2
    RTOL = 5e-2

    # Small batch (single grid step, full-extent tile).
    batch = 8
    x = jax.random.normal(kx1, (batch, input_dim), jnp.float32)
    out = jax.block_until_ready(fwd(x))
    ref = reference_forward(x, params)
    assert out.shape == (batch, output_dim), out.shape
    assert jnp.allclose(out, ref, atol=ATOL, rtol=RTOL), float(jnp.max(jnp.abs(out - ref)))

    # Larger, non-multiple batch: exercises batch padding to a 16-row multiple.
    batch2 = 300
    x2 = jax.random.normal(kx2, (batch2, input_dim), jnp.float32)
    out2 = jax.block_until_ready(fwd(x2))
    ref2 = reference_forward(x2, params)
    assert out2.shape == (batch2, output_dim), out2.shape
    assert jnp.allclose(out2, ref2, atol=ATOL, rtol=RTOL), float(jnp.max(jnp.abs(out2 - ref2)))

    print("KERNEL_OK")
</pallas_src>

<mosaic_0001>
module attributes {stable_mosaic.version = 11 : i64} {
  func.func @mlp_kernel(%arg0: i32, %arg1: memref<16x32xbf16, #tpu.memory_space<vmem>>, %arg2: memref<32x128xbf16, #tpu.memory_space<vmem>>, %arg3: memref<1x128xf32, #tpu.memory_space<vmem>>, %arg4: memref<128x128xbf16, #tpu.memory_space<vmem>>, %arg5: memref<1x128xf32, #tpu.memory_space<vmem>>, %arg6: memref<128x128xbf16, #tpu.memory_space<vmem>>, %arg7: memref<1x128xf32, #tpu.memory_space<vmem>>, %arg8: memref<128x128xbf16, #tpu.memory_space<vmem>>, %arg9: memref<1x128xf32, #tpu.memory_space<vmem>>, %arg10: memref<16x128xf32, #tpu.memory_space<vmem>>) attributes {dimension_semantics = [#tpu.dimension_semantics<parallel>], iteration_bounds = array<i64: 1>, scalar_prefetch = 0 : i64, scratch_operands = 0 : i64, tpu.core_type = #tpu.core_type<tc>, window_params = [{transform_indices = @transform_0, window_bounds = array<i64: 16, 32>}, {pipeline_mode = #tpu.pipeline_mode<synchronous>, transform_indices = @transform_1, window_bounds = array<i64: 32, 128>}, {pipeline_mode = #tpu.pipeline_mode<synchronous>, transform_indices = @transform_2, window_bounds = array<i64: 1, 128>}, {pipeline_mode = #tpu.pipeline_mode<synchronous>, transform_indices = @transform_3, window_bounds = array<i64: 128, 128>}, {pipeline_mode = #tpu.pipeline_mode<synchronous>, transform_indices = @transform_4, window_bounds = array<i64: 1, 128>}, {pipeline_mode = #tpu.pipeline_mode<synchronous>, transform_indices = @transform_5, window_bounds = array<i64: 128, 128>}, {pipeline_mode = #tpu.pipeline_mode<synchronous>, transform_indices = @transform_6, window_bounds = array<i64: 1, 128>}, {pipeline_mode = #tpu.pipeline_mode<synchronous>, transform_indices = @transform_7, window_bounds = array<i64: 128, 128>}, {pipeline_mode = #tpu.pipeline_mode<synchronous>, transform_indices = @transform_8, window_bounds = array<i64: 1, 128>}, {transform_indices = @transform_9, window_bounds = array<i64: 16, 128>}]} {
    %c0 = arith.constant 0 : index
    %c0_0 = arith.constant 0 : index
    %0 = vector.load %arg1[%c0, %c0_0] : memref<16x32xbf16, #tpu.memory_space<vmem>>, vector<16x32xbf16>
    %c0_1 = arith.constant 0 : index
    %c0_2 = arith.constant 0 : index
    %1 = vector.load %arg2[%c0_1, %c0_2] : memref<32x128xbf16, #tpu.memory_space<vmem>>, vector<32x128xbf16>
    %cst = arith.constant dense<0.000000e+00> : vector<16x128xf32>
    %2 = tpu.matmul %0, %1, %cst {dimension_numbers = #tpu.dot_dimension_numbers<[1], [0], [0], [1], [0, 0, 1, 1], [], []>} : vector<16x32xbf16>, vector<32x128xbf16>, vector<16x128xf32> -> vector<16x128xf32>
    %c0_3 = arith.constant 0 : index
    %c0_4 = arith.constant 0 : index
    %3 = vector.load %arg3[%c0_3, %c0_4] : memref<1x128xf32, #tpu.memory_space<vmem>>, vector<1x128xf32>
    %4 = vector.broadcast %3 : vector<1x128xf32> to vector<16x128xf32>
    %5 = arith.addf %2, %4 : vector<16x128xf32>
    %cst_5 = arith.constant 0.000000e+00 : f32
    %6 = vector.broadcast %cst_5 : f32 to vector<16x128xf32>
    %7 = arith.maximumf %5, %6 : vector<16x128xf32>
    %8 = arith.truncf %7 : vector<16x128xf32> to vector<16x128xbf16>
    %c0_6 = arith.constant 0 : index
    %c0_7 = arith.constant 0 : index
    %9 = vector.load %arg4[%c0_6, %c0_7] : memref<128x128xbf16, #tpu.memory_space<vmem>>, vector<128x128xbf16>
    %cst_8 = arith.constant dense<0.000000e+00> : vector<16x128xf32>
    %10 = tpu.matmul %8, %9, %cst_8 {dimension_numbers = #tpu.dot_dimension_numbers<[1], [0], [0], [1], [0, 0, 1, 1], [], []>} : vector<16x128xbf16>, vector<128x128xbf16>, vector<16x128xf32> -> vector<16x128xf32>
    %c0_9 = arith.constant 0 : index
    %c0_10 = arith.constant 0 : index
    %11 = vector.load %arg5[%c0_9, %c0_10] : memref<1x128xf32, #tpu.memory_space<vmem>>, vector<1x128xf32>
    %12 = vector.broadcast %11 : vector<1x128xf32> to vector<16x128xf32>
    %13 = arith.addf %10, %12 : vector<16x128xf32>
    %cst_11 = arith.constant 0.000000e+00 : f32
    %14 = vector.broadcast %cst_11 : f32 to vector<16x128xf32>
    %15 = arith.maximumf %13, %14 : vector<16x128xf32>
    %16 = arith.truncf %15 : vector<16x128xf32> to vector<16x128xbf16>
    %c0_12 = arith.constant 0 : index
    %c0_13 = arith.constant 0 : index
    %17 = vector.load %arg6[%c0_12, %c0_13] : memref<128x128xbf16, #tpu.memory_space<vmem>>, vector<128x128xbf16>
    %cst_14 = arith.constant dense<0.000000e+00> : vector<16x128xf32>
    %18 = tpu.matmul %16, %17, %cst_14 {dimension_numbers = #tpu.dot_dimension_numbers<[1], [0], [0], [1], [0, 0, 1, 1], [], []>} : vector<16x128xbf16>, vector<128x128xbf16>, vector<16x128xf32> -> vector<16x128xf32>
    %c0_15 = arith.constant 0 : index
    %c0_16 = arith.constant 0 : index
    %19 = vector.load %arg7[%c0_15, %c0_16] : memref<1x128xf32, #tpu.memory_space<vmem>>, vector<1x128xf32>
    %20 = vector.broadcast %19 : vector<1x128xf32> to vector<16x128xf32>
    %21 = arith.addf %18, %20 : vector<16x128xf32>
    %cst_17 = arith.constant 0.000000e+00 : f32
    %22 = vector.broadcast %cst_17 : f32 to vector<16x128xf32>
    %23 = arith.maximumf %21, %22 : vector<16x128xf32>
    %24 = arith.truncf %23 : vector<16x128xf32> to vector<16x128xbf16>
    %c0_18 = arith.constant 0 : index
    %c0_19 = arith.constant 0 : index
    %25 = vector.load %arg8[%c0_18, %c0_19] : memref<128x128xbf16, #tpu.memory_space<vmem>>, vector<128x128xbf16>
    %cst_20 = arith.constant dense<0.000000e+00> : vector<16x128xf32>
    %26 = tpu.matmul %24, %25, %cst_20 {dimension_numbers = #tpu.dot_dimension_numbers<[1], [0], [0], [1], [0, 0, 1, 1], [], []>} : vector<16x128xbf16>, vector<128x128xbf16>, vector<16x128xf32> -> vector<16x128xf32>
    %c0_21 = arith.constant 0 : index
    %c0_22 = arith.constant 0 : index
    %27 = vector.load %arg9[%c0_21, %c0_22] : memref<1x128xf32, #tpu.memory_space<vmem>>, vector<1x128xf32>
    %28 = vector.broadcast %27 : vector<1x128xf32> to vector<16x128xf32>
    %29 = arith.addf %26, %28 : vector<16x128xf32>
    %c0_23 = arith.constant 0 : index
    %c0_24 = arith.constant 0 : index
    %30 = vector.load %arg10[%c0_23, %c0_24] : memref<16x128xf32, #tpu.memory_space<vmem>>, vector<16x128xf32>
    tpu.vector_store %arg10[%c0_23, %c0_24], %29 {strides = array<i32>} : memref<16x128xf32, #tpu.memory_space<vmem>>, vector<16x128xf32>,
    return
  }
  func.func @transform_0(%arg0: i32) -> (i32, i32) {
    %c0_i32 = arith.constant 0 : i32
    %c0_i32_0 = arith.constant 0 : i32
    return %arg0, %c0_i32 : i32, i32
  }
  func.func @transform_1(%arg0: i32) -> (i32, i32) {
    %c0_i32 = arith.constant 0 : i32
    %c0_i32_0 = arith.constant 0 : i32
    %c0_i32_1 = arith.constant 0 : i32
    return %c0_i32, %c0_i32_0 : i32, i32
  }
  func.func @transform_2(%arg0: i32) -> (i32, i32) {
    %c0_i32 = arith.constant 0 : i32
    %c0_i32_0 = arith.constant 0 : i32
    %c0_i32_1 = arith.constant 0 : i32
    return %c0_i32, %c0_i32_0 : i32, i32
  }
  func.func @transform_3(%arg0: i32) -> (i32, i32) {
    %c0_i32 = arith.constant 0 : i32
    %c0_i32_0 = arith.constant 0 : i32
    %c0_i32_1 = arith.constant 0 : i32
    return %c0_i32, %c0_i32_0 : i32, i32
  }
  func.func @transform_4(%arg0: i32) -> (i32, i32) {
    %c0_i32 = arith.constant 0 : i32
    %c0_i32_0 = arith.constant 0 : i32
    %c0_i32_1 = arith.constant 0 : i32
    return %c0_i32, %c0_i32_0 : i32, i32
  }
  func.func @transform_5(%arg0: i32) -> (i32, i32) {
    %c0_i32 = arith.constant 0 : i32
    %c0_i32_0 = arith.constant 0 : i32
    %c0_i32_1 = arith.constant 0 : i32
    return %c0_i32, %c0_i32_0 : i32, i32
  }
  func.func @transform_6(%arg0: i32) -> (i32, i32) {
    %c0_i32 = arith.constant 0 : i32
    %c0_i32_0 = arith.constant 0 : i32
    %c0_i32_1 = arith.constant 0 : i32
    return %c0_i32, %c0_i32_0 : i32, i32
  }
  func.func @transform_7(%arg0: i32) -> (i32, i32) {
    %c0_i32 = arith.constant 0 : i32
    %c0_i32_0 = arith.constant 0 : i32
    %c0_i32_1 = arith.constant 0 : i32
    return %c0_i32, %c0_i32_0 : i32, i32
  }
  func.func @transform_8(%arg0: i32) -> (i32, i32) {
    %c0_i32 = arith.constant 0 : i32
    %c0_i32_0 = arith.constant 0 : i32
    %c0_i32_1 = arith.constant 0 : i32
    return %c0_i32, %c0_i32_0 : i32, i32
  }
  func.func @transform_9(%arg0: i32) -> (i32, i32) {
    %c0_i32 = arith.constant 0 : i32
    %c0_i32_0 = arith.constant 0 : i32
    return %arg0, %c0_i32 : i32, i32
  }
}

</mosaic_0001>

<llo_original>
// kernel: mlp_classifier_forward.1
$region0: #{mlp_classifier_forward.1}
  #allocation0 [shape = 'u32[]', space=smem, size = 0x4, offset = 0x4, fixed_abs, tag = 'smem constant byte address 0x4 - core index']
  #allocation1 [shape = 'u32[144,128]{1,0:T(1,128)}', space=vmem, size = 0x12000, scoped, tag = 'internal scratch']
  %s0 = inlined_call_operand.vmem [shape: bf16[16,32], index: 0, kind: input, shape index: {}]
  %s1 = inlined_call_operand.vmem [shape: bf16[32,128], index: 1, kind: input, shape index: {}]
  %s2 = inlined_call_operand.vmem [shape: f32[1,128], index: 2, kind: input, shape index: {}]
  %s3 = inlined_call_operand.hbm [shape: bf16[128,128], index: 3, kind: input, shape index: {}]
  %s4 = inlined_call_operand.vmem [shape: f32[1,128], index: 4, kind: input, shape index: {}]
  %s5 = inlined_call_operand.hbm [shape: bf16[128,128], index: 5, kind: input, shape index: {}]
  %s6 = inlined_call_operand.vmem [shape: f32[1,128], index: 6, kind: input, shape index: {}]
  %s7 = inlined_call_operand.hbm [shape: bf16[128,128], index: 7, kind: input, shape index: {}]
  %s8 = inlined_call_operand.vmem [shape: f32[1,128], index: 8, kind: input, shape index: {}]
  %s9 = inlined_call_operand.vmem [shape: f32[16,128], index: 9, kind: output, shape index: {}]
  %s10 = sld [smem:[#allocation0]]
  $region58: #{mlp_classifier_forward.1} parent=0
    _
  %s12 = ssub.s32 1, %s10
  %s13 = scalar_select 0, %s12, %s10
  $region1: #{mlp_classifier_forward.1} parent=0
    #allocation2 [shape = 'u8[32768]{0}', space=vmem, size = 0x8000, scoped, tag = 'input window, operand 3, single buffered']
    #allocation3 [shape = 's32[1]{0}', space=sflag, size = 0x4, scoped, tag = 'scoped memory for mlp_classifier_forward.1']
    #allocation4 [shape = 'u8[32768]{0}', space=vmem, size = 0x8000, scoped, tag = 'input window, operand 5, single buffered']
    #allocation5 [shape = 's32[1]{0}', space=sflag, size = 0x4, scoped, tag = 'scoped memory for mlp_classifier_forward.1']
    #allocation6 [shape = 'u8[32768]{0}', space=vmem, size = 0x8000, scoped, tag = 'input window, operand 7, single buffered']
    %14 = vsyncpa [#allocation3], 0
    %15 = vsyncpa [#allocation5], 0
    // Predicated region
    $region2: #{mlp_classifier_forward.1} parent=1 // pred_check
      _
    $region3: #{mlp_classifier_forward.1} parent=1 // pred_check_branch
      %17 = sbr.rel (0) target = $region5
    $region4: #{mlp_classifier_forward.1} parent=1 // pred_region
      _
    $region5: #{mlp_classifier_forward.1} parent=1 // pred_fallthru
      _
    // Predicated region
    $region6: #{mlp_classifier_forward.1} parent=1 // pred_check
      _
    $region7: #{mlp_classifier_forward.1} parent=1 // pred_check_branch
      %19 = sbr.rel (0) target = $region9
    $region8: #{mlp_classifier_forward.1} parent=1 // pred_region
      _
    $region9: #{mlp_classifier_forward.1} parent=1 // pred_fallthru
      _
    // Predicated region
    $region10: #{mlp_classifier_forward.1} parent=1 // pred_check
      _
    $region11: #{mlp_classifier_forward.1} parent=1 // pred_check_branch
      %21 = sbr.rel (0) target = $region13
    $region12: #{mlp_classifier_forward.1} parent=1 // pred_region
      _
    $region13: #{mlp_classifier_forward.1} parent=1 // pred_fallthru
      _
    // Predicated region
    $region14: #{mlp_classifier_forward.1} parent=1 // pred_check
      _
    $region15: #{mlp_classifier_forward.1} parent=1 // pred_check_branch
      %23 = sbr.rel (0) target = $region17
    $region16: #{mlp_classifier_forward.1} parent=1 // pred_region
      %s25 = ssub.s32 1024, 1024
      %26 = vsyncadd [#allocation3], %s25
      %s27 = sshll.u32 [#allocation2], 4
      %s28 = int_to_ptr.vmem [resolvable:$true] %s27
      %33 = dma.hbm_to_vmem [thread:$0]  %s3, 1024, %s28, [#allocation3], 64, 64, 4
    $region17: #{mlp_classifier_forward.1} parent=1 // pred_fallthru
      _
    // Predicated region
    $region18: #{mlp_classifier_forward.1} parent=1 // pred_check
      _
    $region19: #{mlp_classifier_forward.1} parent=1 // pred_check_branch
      %35 = sbr.rel (0) target = $region21
    $region20: #{mlp_classifier_forward.1} parent=1 // pred_region
      _
    $region21: #{mlp_classifier_forward.1} parent=1 // pred_fallthru
      _
    // Predicated region
    $region22: #{mlp_classifier_forward.1} parent=1 // pred_check
      _
    $region23: #{mlp_classifier_forward.1} parent=1 // pred_check_branch
      %37 = sbr.rel (0) target = $region25
    $region24: #{mlp_classifier_forward.1} parent=1 // pred_region
      %s39 = ssub.s32 1024, 1024
      %40 = vsyncadd [#allocation5], %s39
      %s41 = sshll.u32 [#allocation4], 4
      %s42 = int_to_ptr.vmem [resolvable:$true] %s41
      %47 = dma.hbm_to_vmem [thread:$0]  %s5, 1024, %s42, [#allocation5], 64, 64, 4
    $region25: #{mlp_classifier_forward.1} parent=1 // pred_fallthru
      _
    // Predicated region
    $region26: #{mlp_classifier_forward.1} parent=1 // pred_check
      _
    $region27: #{mlp_classifier_forward.1} parent=1 // pred_check_branch
      %49 = sbr.rel (0) target = $region29
    $region28: #{mlp_classifier_forward.1} parent=1 // pred_region
      _
    $region29: #{mlp_classifier_forward.1} parent=1 // pred_fallthru
      _
    // Predicated region
    $region30: #{mlp_classifier_forward.1} parent=1 // pred_check
      _
    $region31: #{mlp_classifier_forward.1} parent=1 // pred_check_branch
      %51 = sbr.rel (0) target = $region33
    $region32: #{mlp_classifier_forward.1} parent=1 // pred_region
      %s53 = ssub.s32 1024, 1024
      %54 = vsyncadd [#allocation5], %s53
      %s55 = sshll.u32 [#allocation6], 4
      %s56 = int_to_ptr.vmem [resolvable:$true] %s55
      %61 = dma.hbm_to_vmem [thread:$0]  %s7, 1024, %s56, [#allocation5], 64, 64, 4
    $region33: #{mlp_classifier_forward.1} parent=1 // pred_fallthru
      _
    // Predicated region
    $region34: #{mlp_classifier_forward.1} parent=1 // pred_check
      _
    $region35: #{mlp_classifier_forward.1} parent=1 // pred_check_branch
      %63 = sbr.rel (0) target = $region37
    $region36: #{mlp_classifier_forward.1} parent=1 // pred_region
      _
    $region37: #{mlp_classifier_forward.1} parent=1 // pred_fallthru
      _
    // Predicated region
    $region38: #{mlp_classifier_forward.1} parent=1 // pred_check
      _
    $region39: #{mlp_classifier_forward.1} parent=1 // pred_check_branch
      %65 = sbr.rel (0) target = $region41
    $region40: #{mlp_classifier_forward.1} parent=1 // pred_region
      %66 = dma.done [#allocation3], 1024
    $region41: #{mlp_classifier_forward.1} parent=1 // pred_fallthru
      _
    // Predicated region
    $region42: #{mlp_classifier_forward.1} parent=1 // pred_check
      _
    $region43: #{mlp_classifier_forward.1} parent=1 // pred_check_branch
      %68 = sbr.rel (0) target = $region45
    $region44: #{mlp_classifier_forward.1} parent=1 // pred_region
      %69 = dma.done [#allocation5], 1024
    $region45: #{mlp_classifier_forward.1} parent=1 // pred_fallthru
      _
    // Predicated region
    $region46: #{mlp_classifier_forward.1} parent=1 // pred_check
      _
    $region47: #{mlp_classifier_forward.1} parent=1 // pred_check_branch
      %71 = sbr.rel (0) target = $region49
    $region48: #{mlp_classifier_forward.1} parent=1 // pred_region
      %72 = dma.done [#allocation5], 1024
    $region49: #{mlp_classifier_forward.1} parent=1 // pred_fallthru
      _
    %v74 = vld [vmem:[%s0] sm:$0xf]
    %v75 = vld [vmem:[%s0 + $0x4] sm:$0xf]
    %v76 = vld [vmem:[%s1] sm:$0xf]
    %v77 = vld [vmem:[%s1 + $0x4] sm:$0xf]
    %v78 = vld [vmem:[%s1 + $0x8] sm:$0xf]
    %v79 = vld [vmem:[%s1 + $0xc] sm:$0xf]
    %v80 = vld [vmem:[%s2] sm:$0x1]
    %v82 = vlaneseq
    %v83 = vshrl.u32 %v82, 7
    %v84 = vsub.s32 0, %v83
    %v85 = vrot.slane %v80, %v84
    %v89 = vunpack.c.l.b16 %v74
    %v90 = vunpack.c.l.b16 %v75
    %v91 = vpack.c.b16 %v90, %v89
    %v96 = vunpack.c.l.b16 %v76
    %v97 = vunpack.c.l.b16 %v77
    %v98 = vunpack.c.l.b16 %v78
    %v99 = vunpack.c.l.b16 %v79
    %v100 = vpack.c.b16 %v97, %v96
    %v101 = vpack.c.b16 %v99, %v98
    %vm104 = vcmask 261120
    %v106 = vsel %vm104, %v91, 0
    %108 = vmatprep.subr.bf16.mxu0 0
    %109 = vmatpush1.bf16.msra.mxu0 0
    %110 = vmatprep.subr.bf16.mxu0 0
    %111 = vmatpush1.bf16.msra.mxu0 0
    %112 = vmatprep.subr.bf16.mxu0 0
    %113 = vmatpush1.bf16.msra.mxu0 0
    %114 = vmatprep.subr.bf16.mxu0 0
    %115 = vmatpush1.bf16.msra.mxu0 0
    %116 = vmatprep.subr.bf16.mxu0 0
    %117 = vmatpush1.bf16.msra.mxu0 0
    %118 = vmatprep.subr.bf16.mxu0 0
    %119 = vmatpush1.bf16.msra.mxu0 0
    %120 = vmatprep.subr.bf16.mxu0 0
    %121 = vmatpush1.bf16.msra.mxu0 %v101
    %122 = vmatprep.subr.bf16.mxu0 0
    %123 = vmatpush1.bf16.msra.mxu0 %v100
    %124 = vmatprep.subr.bf16.mxu0 0
    %125 = vmatpush2.bf16.msra.mxu0 0
    %126 = vmatprep.subr.bf16.mxu0 0
    %127 = vmatpush2.bf16.msra.mxu0 0
    %128 = vmatprep.subr.bf16.mxu0 0
    %129 = vmatpush2.bf16.msra.mxu0 0
    %130 = vmatprep.subr.bf16.mxu0 0
    %131 = vmatpush2.bf16.msra.mxu0 0
    %132 = vmatprep.subr.bf16.mxu0 0
    %133 = vmatpush2.bf16.msra.mxu0 0
    %134 = vmatprep.subr.bf16.mxu0 0
    %135 = vmatpush2.bf16.msra.mxu0 0
    %136 = vmatprep.subr.bf16.mxu0 0
    %137 = vmatpush2.bf16.msra.mxu0 0
    %138 = vmatprep.subr.bf16.mxu0 0
    %139 = vmatpush2.bf16.msra.mxu0 0
    %140 = vmatprep.mubr.bf16.mxu0 0
    %141 = vmatmul.mubr.bf16.gmra.mxu0 %v106
    %v142 = vpop.f32.mrf.mxu0
    %v143 = vadd.f32 %v85, %v142
    %v144 = vpop.f32.mrf.mxu0
    %v145 = vpop.f32.mrf.mxu0
    %v146 = vadd.f32 %v85, %v145
    %v147 = vpop.f32.mrf.mxu0
    %148 = vdwg.mxu0
    %v149 = vmax.f32 %v143, 0.0
    %v150 = vmax.f32 %v146, 0.0
    %v151 = vpack.c.bf16 %v150, %v149
    %v152 = vld [vmem:[#allocation2] sm:$0xf]
    %v153 = vld [vmem:[#allocation2 + $0x4] sm:$0xf]
    %v154 = vld [vmem:[#allocation2 + $0x8] sm:$0xf]
    %v155 = vld [vmem:[#allocation2 + $0xc] sm:$0xf]
    %v156 = vld [vmem:[#allocation2 + $0x10] sm:$0xf]
    %v157 = vld [vmem:[#allocation2 + $0x14] sm:$0xf]
    %v158 = vld [vmem:[#allocation2 + $0x18] sm:$0xf]
    %v159 = vld [vmem:[#allocation2 + $0x1c] sm:$0xf]
    %v160 = vld [vmem:[#allocation2 + $0x20] sm:$0xf]
    %v161 = vld [vmem:[#allocation2 + $0x24] sm:$0xf]
    %v162 = vld [vmem:[#allocation2 + $0x28] sm:$0xf]
    %v163 = vld [vmem:[#allocation2 + $0x2c] sm:$0xf]
    %v164 = vld [vmem:[#allocation2 + $0x30] sm:$0xf]
    %v165 = vld [vmem:[#allocation2 + $0x34] sm:$0xf]
    %v166 = vld [vmem:[#allocation2 + $0x38] sm:$0xf]
    %v167 = vld [vmem:[#allocation2 + $0x3c] sm:$0xf]
    %v168 = vld [vmem:[%s4] sm:$0x1]
    %v170 = vlaneseq
    %v171 = vshrl.u32 %v170, 7
    %v172 = vsub.s32 0, %v171
    %v173 = vrot.slane %v168, %v172
    %v191 = vunpack.c.l.b16 %v152
    %v192 = vunpack.c.l.b16 %v153
    %v193 = vunpack.c.l.b16 %v154
    %v194 = vunpack.c.l.b16 %v155
    %v195 = vunpack.c.l.b16 %v156
    %v196 = vunpack.c.l.b16 %v157
    %v197 = vunpack.c.l.b16 %v158
    %v198 = vunpack.c.l.b16 %v159
    %v199 = vunpack.c.l.b16 %v160
    %v200 = vunpack.c.l.b16 %v161
    %v201 = vunpack.c.l.b16 %v162
    %v202 = vunpack.c.l.b16 %v163
    %v203 = vunpack.c.l.b16 %v164
    %v204 = vunpack.c.l.b16 %v165
    %v205 = vunpack.c.l.b16 %v166
    %v206 = vunpack.c.l.b16 %v167
    %v207 = vpack.c.b16 %v192, %v191
    %v208 = vpack.c.b16 %v194, %v193
    %v209 = vpack.c.b16 %v196, %v195
    %v210 = vpack.c.b16 %v198, %v197
    %v211 = vpack.c.b16 %v200, %v199
    %v212 = vpack.c.b16 %v202, %v201
    %v213 = vpack.c.b16 %v204, %v203
    %v214 = vpack.c.b16 %v206, %v205
    %223 = vmatprep.subr.bf16.mxu0 0
    %224 = vmatpush1.bf16.msra.mxu0 %v214
    %225 = vmatprep.subr.bf16.mxu0 0
    %226 = vmatpush1.bf16.msra.mxu0 %v213
    %227 = vmatprep.subr.bf16.mxu0 0
    %228 = vmatpush1.bf16.msra.mxu0 %v212
    %229 = vmatprep.subr.bf16.mxu0 0
    %230 = vmatpush1.bf16.msra.mxu0 %v211
    %231 = vmatprep.subr.bf16.mxu0 0
    %232 = vmatpush1.bf16.msra.mxu0 %v210
    %233 = vmatprep.subr.bf16.mxu0 0
    %234 = vmatpush1.bf16.msra.mxu0 %v209
    %235 = vmatprep.subr.bf16.mxu0 0
    %236 = vmatpush1.bf16.msra.mxu0 %v208
    %237 = vmatprep.subr.bf16.mxu0 0
    %238 = vmatpush1.bf16.msra.mxu0 %v207
    %239 = vmatprep.subr.bf16.mxu0 0
    %240 = vmatpush2.bf16.msra.mxu0 0
    %241 = vmatprep.subr.bf16.mxu0 0
    %242 = vmatpush2.bf16.msra.mxu0 0
    %243 = vmatprep.subr.bf16.mxu0 0
    %244 = vmatpush2.bf16.msra.mxu0 0
    %245 = vmatprep.subr.bf16.mxu0 0
    %246 = vmatpush2.bf16.msra.mxu0 0
    %247 = vmatprep.subr.bf16.mxu0 0
    %248 = vmatpush2.bf16.msra.mxu0 0
    %249 = vmatprep.subr.bf16.mxu0 0
    %250 = vmatpush2.bf16.msra.mxu0 0
    %251 = vmatprep.subr.bf16.mxu0 0
    %252 = vmatpush2.bf16.msra.mxu0 0
    %253 = vmatprep.subr.bf16.mxu0 0
    %254 = vmatpush2.bf16.msra.mxu0 0
    %255 = vmatprep.mubr.bf16.mxu0 0
    %256 = vmatmul.mubr.bf16.gmra.mxu0 %v151
    %v257 = vpop.f32.mrf.mxu0
    %v258 = vadd.f32 %v173, %v257
    %v259 = vpop.f32.mrf.mxu0
    %v260 = vpop.f32.mrf.mxu0
    %v261 = vadd.f32 %v173, %v260
    %v262 = vpop.f32.mrf.mxu0
    %263 = vdwg.mxu0
    %v264 = vmax.f32 %v258, 0.0
    %v265 = vmax.f32 %v261, 0.0
    %v266 = vpack.c.bf16 %v265, %v264
    %v267 = vld [vmem:[#allocation4] sm:$0xf]
    %v268 = vld [vmem:[#allocation4 + $0x4] sm:$0xf]
    %v269 = vld [vmem:[#allocation4 + $0x8] sm:$0xf]
    %v270 = vld [vmem:[#allocation4 + $0xc] sm:$0xf]
    %v271 = vld [vmem:[#allocation4 + $0x10] sm:$0xf]
    %v272 = vld [vmem:[#allocation4 + $0x14] sm:$0xf]
    %v273 = vld [vmem:[#allocation4 + $0x18] sm:$0xf]
    %v274 = vld [vmem:[#allocation4 + $0x1c] sm:$0xf]
    %v275 = vld [vmem:[#allocation4 + $0x20] sm:$0xf]
    %v276 = vld [vmem:[#allocation4 + $0x24] sm:$0xf]
    %v277 = vld [vmem:[#allocation4 + $0x28] sm:$0xf]
    %v278 = vld [vmem:[#allocation4 + $0x2c] sm:$0xf]
    %v279 = vld [vmem:[#allocation4 + $0x30] sm:$0xf]
    %v280 = vld [vmem:[#allocation4 + $0x34] sm:$0xf]
    %v281 = vld [vmem:[#allocation4 + $0x38] sm:$0xf]
    %v282 = vld [vmem:[#allocation4 + $0x3c] sm:$0xf]
    %v283 = vld [vmem:[%s6] sm:$0x1]
    %v285 = vlaneseq
    %v286 = vshrl.u32 %v285, 7
    %v287 = vsub.s32 0, %v286
    %v288 = vrot.slane %v283, %v287
    %v306 = vunpack.c.l.b16 %v267
    %v307 = vunpack.c.l.b16 %v268
    %v308 = vunpack.c.l.b16 %v269
    %v309 = vunpack.c.l.b16 %v270
    %v310 = vunpack.c.l.b16 %v271
    %v311 = vunpack.c.l.b16 %v272
    %v312 = vunpack.c.l.b16 %v273
    %v313 = vunpack.c.l.b16 %v274
    %v314 = vunpack.c.l.b16 %v275
    %v315 = vunpack.c.l.b16 %v276
    %v316 = vunpack.c.l.b16 %v277
    %v317 = vunpack.c.l.b16 %v278
    %v318 = vunpack.c.l.b16 %v279
    %v319 = vunpack.c.l.b16 %v280
    %v320 = vunpack.c.l.b16 %v281
    %v321 = vunpack.c.l.b16 %v282
    %v322 = vpack.c.b16 %v307, %v306
    %v323 = vpack.c.b16 %v309, %v308
    %v324 = vpack.c.b16 %v311, %v310
    %v325 = vpack.c.b16 %v313, %v312
    %v326 = vpack.c.b16 %v315, %v314
    %v327 = vpack.c.b16 %v317, %v316
    %v328 = vpack.c.b16 %v319, %v318
    %v329 = vpack.c.b16 %v321, %v320
    %338 = vmatprep.subr.bf16.mxu0 0
    %339 = vmatpush1.bf16.msra.mxu0 %v329
    %340 = vmatprep.subr.bf16.mxu0 0
    %341 = vmatpush1.bf16.msra.mxu0 %v328
    %342 = vmatprep.subr.bf16.mxu0 0
    %343 = vmatpush1.bf16.msra.mxu0 %v327
    %344 = vmatprep.subr.bf16.mxu0 0
    %345 = vmatpush1.bf16.msra.mxu0 %v326
    %346 = vmatprep.subr.bf16.mxu0 0
    %347 = vmatpush1.bf16.msra.mxu0 %v325
    %348 = vmatprep.subr.bf16.mxu0 0
    %349 = vmatpush1.bf16.msra.mxu0 %v324
    %350 = vmatprep.subr.bf16.mxu0 0
    %351 = vmatpush1.bf16.msra.mxu0 %v323
    %352 = vmatprep.subr.bf16.mxu0 0
    %353 = vmatpush1.bf16.msra.mxu0 %v322
    %354 = vmatprep.subr.bf16.mxu0 0
    %355 = vmatpush2.bf16.msra.mxu0 0
    %356 = vmatprep.subr.bf16.mxu0 0
    %357 = vmatpush2.bf16.msra.mxu0 0
    %358 = vmatprep.subr.bf16.mxu0 0
    %359 = vmatpush2.bf16.msra.mxu0 0
    %360 = vmatprep.subr.bf16.mxu0 0
    %361 = vmatpush2.bf16.msra.mxu0 0
    %362 = vmatprep.subr.bf16.mxu0 0
    %363 = vmatpush2.bf16.msra.mxu0 0
    %364 = vmatprep.subr.bf16.mxu0 0
    %365 = vmatpush2.bf16.msra.mxu0 0
    %366 = vmatprep.subr.bf16.mxu0 0
    %367 = vmatpush2.bf16.msra.mxu0 0
    %368 = vmatprep.subr.bf16.mxu0 0
    %369 = vmatpush2.bf16.msra.mxu0 0
    %370 = vmatprep.mubr.bf16.mxu0 0
    %371 = vmatmul.mubr.bf16.gmra.mxu0 %v266
    %v372 = vpop.f32.mrf.mxu0
    %v373 = vadd.f32 %v288, %v372
    %v374 = vpop.f32.mrf.mxu0
    %v375 = vpop.f32.mrf.mxu0
    %v376 = vadd.f32 %v288, %v375
    %v377 = vpop.f32.mrf.mxu0
    %378 = vdwg.mxu0
    %v379 = vmax.f32 %v373, 0.0
    %v380 = vmax.f32 %v376, 0.0
    %v381 = vpack.c.bf16 %v380, %v379
    %v382 = vld [vmem:[#allocation6] sm:$0xf]
    %v383 = vld [vmem:[#allocation6 + $0x4] sm:$0xf]
    %v384 = vld [vmem:[#allocation6 + $0x8] sm:$0xf]
    %v385 = vld [vmem:[#allocation6 + $0xc] sm:$0xf]
    %v386 = vld [vmem:[#allocation6 + $0x10] sm:$0xf]
    %v387 = vld [vmem:[#allocation6 + $0x14] sm:$0xf]
    %v388 = vld [vmem:[#allocation6 + $0x18] sm:$0xf]
    %v389 = vld [vmem:[#allocation6 + $0x1c] sm:$0xf]
    %v390 = vld [vmem:[#allocation6 + $0x20] sm:$0xf]
    %v391 = vld [vmem:[#allocation6 + $0x24] sm:$0xf]
    %v392 = vld [vmem:[#allocation6 + $0x28] sm:$0xf]
    %v393 = vld [vmem:[#allocation6 + $0x2c] sm:$0xf]
    %v394 = vld [vmem:[#allocation6 + $0x30] sm:$0xf]
    %v395 = vld [vmem:[#allocation6 + $0x34] sm:$0xf]
    %v396 = vld [vmem:[#allocation6 + $0x38] sm:$0xf]
    %v397 = vld [vmem:[#allocation6 + $0x3c] sm:$0xf]
    %v398 = vld [vmem:[%s8] sm:$0x1]
    %v400 = vlaneseq
    %v401 = vshrl.u32 %v400, 7
    %v402 = vsub.s32 0, %v401
    %v403 = vrot.slane %v398, %v402
    %v421 = vunpack.c.l.b16 %v382
    %v422 = vunpack.c.l.b16 %v383
    %v423 = vunpack.c.l.b16 %v384
    %v424 = vunpack.c.l.b16 %v385
    %v425 = vunpack.c.l.b16 %v386
    %v426 = vunpack.c.l.b16 %v387
    %v427 = vunpack.c.l.b16 %v388
    %v428 = vunpack.c.l.b16 %v389
    %v429 = vunpack.c.l.b16 %v390
    %v430 = vunpack.c.l.b16 %v391
    %v431 = vunpack.c.l.b16 %v392
    %v432 = vunpack.c.l.b16 %v393
    %v433 = vunpack.c.l.b16 %v394
    %v434 = vunpack.c.l.b16 %v395
    %v435 = vunpack.c.l.b16 %v396
    %v436 = vunpack.c.l.b16 %v397
    %v437 = vpack.c.b16 %v422, %v421
    %v438 = vpack.c.b16 %v424, %v423
    %v439 = vpack.c.b16 %v426, %v425
    %v440 = vpack.c.b16 %v428, %v427
    %v441 = vpack.c.b16 %v430, %v429
    %v442 = vpack.c.b16 %v432, %v431
    %v443 = vpack.c.b16 %v434, %v433
    %v444 = vpack.c.b16 %v436, %v435
    %453 = vmatprep.subr.bf16.mxu0 0
    %454 = vmatpush1.bf16.msra.mxu0 %v444
    %455 = vmatprep.subr.bf16.mxu0 0
    %456 = vmatpush1.bf16.msra.mxu0 %v443
    %457 = vmatprep.subr.bf16.mxu0 0
    %458 = vmatpush1.bf16.msra.mxu0 %v442
    %459 = vmatprep.subr.bf16.mxu0 0
    %460 = vmatpush1.bf16.msra.mxu0 %v441
    %461 = vmatprep.subr.bf16.mxu0 0
    %462 = vmatpush1.bf16.msra.mxu0 %v440
    %463 = vmatprep.subr.bf16.mxu0 0
    %464 = vmatpush1.bf16.msra.mxu0 %v439
    %465 = vmatprep.subr.bf16.mxu0 0
    %466 = vmatpush1.bf16.msra.mxu0 %v438
    %467 = vmatprep.subr.bf16.mxu0 0
    %468 = vmatpush1.bf16.msra.mxu0 %v437
    %469 = vmatprep.subr.bf16.mxu0 0
    %470 = vmatpush2.bf16.msra.mxu0 0
    %471 = vmatprep.subr.bf16.mxu0 0
    %472 = vmatpush2.bf16.msra.mxu0 0
    %473 = vmatprep.subr.bf16.mxu0 0
    %474 = vmatpush2.bf16.msra.mxu0 0
    %475 = vmatprep.subr.bf16.mxu0 0
    %476 = vmatpush2.bf16.msra.mxu0 0
    %477 = vmatprep.subr.bf16.mxu0 0
    %478 = vmatpush2.bf16.msra.mxu0 0
    %479 = vmatprep.subr.bf16.mxu0 0
    %480 = vmatpush2.bf16.msra.mxu0 0
    %481 = vmatprep.subr.bf16.mxu0 0
    %482 = vmatpush2.bf16.msra.mxu0 0
    %483 = vmatprep.subr.bf16.mxu0 0
    %484 = vmatpush2.bf16.msra.mxu0 0
    %485 = vmatprep.mubr.bf16.mxu0 0
    %486 = vmatmul.mubr.bf16.gmra.mxu0 %v381
    %v487 = vpop.f32.mrf.mxu0
    %v488 = vadd.f32 %v403, %v487
    %v489 = vpop.f32.mrf.mxu0
    %v490 = vpop.f32.mrf.mxu0
    %v491 = vadd.f32 %v403, %v490
    %v492 = vpop.f32.mrf.mxu0
    %493 = vdwg.mxu0
    %494 = vst [vmem:[%s9] sm:$0xff] %v488
    %495 = vst [vmem:[%s9 + $0x8] sm:$0xff] %v491
    // Predicated region
    $region50: #{mlp_classifier_forward.1} parent=1 // pred_check
      _
    $region51: #{mlp_classifier_forward.1} parent=1 // pred_check_branch
      %497 = sbr.rel (0) target = $region53
    $region52: #{mlp_classifier_forward.1} parent=1 // pred_region
      _
    $region53: #{mlp_classifier_forward.1} parent=1 // pred_fallthru
      _
    // Predicated region
    $region54: #{mlp_classifier_forward.1} parent=1 // pred_check
      _
    $region55: #{mlp_classifier_forward.1} parent=1 // pred_check_branch
      %499 = sbr.rel (0) target = $region57
    $region56: #{mlp_classifier_forward.1} parent=1 // pred_region
      _
    $region57: #{mlp_classifier_forward.1} parent=1 // pred_fallthru
      _
    %500 = vsyncpa [#allocation3], 1
    %501 = vsyncpa [#allocation5], 1

</llo_original>
